<compile_context>
chip_gen: v7x
topology: tpu7x:2x2x1
jax: 0.10.0
libtpu: 0.0.40
codegen_flags: <defaults>
</compile_context>

<pallas_src>
import functools
import math

import numpy as np
import jax
import jax.numpy as jnp
from jax.experimental import pallas as pl
from jax.experimental.pallas import tpu as pltpu

NEG_SLOPE = 0.1   # LeakyReLU slope hard-coded in the PyTorch module
CA_MID = 4        # squeeze width hard-coded in the PyTorch module


# ---------------------------------------------------------------------------
# Fused kernel: avgpool -> 1x1 conv -> leaky -> 1x1 conv -> sigmoid -> x * s
# ---------------------------------------------------------------------------
def _calayer_kernel(g_ref, p_ref, x_ref, o_ref, *, ca_mid, inv_hw, neg_slope):
    """One block = Nb whole samples laid out as (Rb = Nb*C, HWp) rows.

    g_ref: (Rb, Rb)  f32  block-diagonal ones: G[r, r'] = 1 iff same sample
    p_ref: (Rb, 3*ca_mid + 1) f32  per-row packed params [W1ᵀ | W2 | b1 | b2]
    x_ref: (Rb, HWp) activation rows (native dtype), spatial on the lane axis
    o_ref: (Rb, HWp) gated output
    """
    x = x_ref[...]                                                  # native dtype
    # Global average pool over the (lane) spatial axis, accumulated in f32.
    # Zero-padded spatial lanes do not perturb the sum; inv_hw uses true H*W.
    pooled = jnp.sum(x.astype(jnp.float32), axis=-1, keepdims=True) * inv_hw  # (Rb, 1)

    w1_rep = p_ref[:, 0:ca_mid]                     # row n*C+c -> W1[:, c]
    w2_rep = p_ref[:, ca_mid:2 * ca_mid]            # row n*C+c -> W2[c, :]
    b1_rep = p_ref[:, 2 * ca_mid:3 * ca_mid]        # b1 replicated to all rows
    b2_rep = p_ref[:, 3 * ca_mid:3 * ca_mid + 1]    # row n*C+c -> b2[c]

    # Squeeze: z[n, m] = sum_c pooled[n, c] * W1[m, c].
    # G group-sums over each sample's C rows AND broadcasts the result back
    # to every row of that sample in one tiny matmul -> no reshapes needed.
    prod = pooled * w1_rep                                          # (Rb, CA)
    z = jnp.dot(g_ref[...], prod, preferred_element_type=jnp.float32)  # (Rb, CA)
    z = z + b1_rep
    z = jnp.where(z >= 0.0, z, neg_slope * z)                       # LeakyReLU(0.1)

    # Excite: u[n, c] = sum_m z[n, m] * W2[c, m] + b2[c]  (row-wise, 4 lanes)
    u = jnp.sum(z * w2_rep, axis=-1, keepdims=True) + b2_rep        # (Rb, 1)
    s = jax.nn.sigmoid(u)                                           # (Rb, 1)

    # Channel gating in the activation dtype (bf16 stays bf16 on v6e/v7x).
    o_ref[...] = x * s.astype(x.dtype)


# ---------------------------------------------------------------------------
# Wrapper: layout, tiling heuristics, parameter packing
# ---------------------------------------------------------------------------
def calayer_pallas(x, w1, b1, w2, b2, *,
                   target_block_bytes=2 * 1024 * 1024,
                   max_block_rows=256,
                   min_grid_steps=4):
    """CALayer forward.

    x : (N, C, H, W)      activation (f32 or bf16), PyTorch NCHW
    w1: (CA_MID, C)       Conv2d(C, 4, 1) weight[:, :, 0, 0]
    b1: (CA_MID,)         its bias
    w2: (C, CA_MID)       Conv2d(4, C, 1) weight[:, :, 0, 0]
    b2: (C,)              its bias
    """
    N, C, H, W = x.shape
    ca = w1.shape[0]
    HW = H * W
    HWp = ((HW + 127) // 128) * 128                  # lane-dense spatial width
    itemsize = jnp.dtype(x.dtype).itemsize

    # --- pick samples-per-block Nb --------------------------------------
    sublane = max(8, 32 // itemsize)                 # 8 (f32), 16 (bf16), ...
    base_nb = (sublane * C // math.gcd(sublane, C)) // C   # min Nb: Nb*C % sublane == 0

    def _cap(v):                                     # floor to base_nb, >= base_nb
        return max(base_nb, (v // base_nb) * base_nb)

    nb_bytes_cap = _cap(target_block_bytes // (HWp * itemsize * C))
    nb_rows_cap = _cap(max_block_rows // C)
    nb_steps_cap = _cap(N // min_grid_steps)         # keep >= min_grid_steps when possible
    nb_batch_cap = max(base_nb, ((N + base_nb - 1) // base_nb) * base_nb)
    Nb = min(nb_bytes_cap, nb_rows_cap, nb_steps_cap, nb_batch_cap)

    Rb = Nb * C                                      # rows/block, multiple of sublane
    N_pad = ((N + Nb - 1) // Nb) * Nb
    num_blocks = N_pad // Nb

    # --- pad / flatten x into a lane-dense (rows, HWp) slab --------------
    xf = x.reshape(N, C, HW)
    if HWp != HW:
        xf = jnp.pad(xf, ((0, 0), (0, 0), (0, HWp - HW)))
    if N_pad != N:
        xf = jnp.pad(xf, ((0, N_pad - N), (0, 0), (0, 0)))
    xf = xf.reshape(N_pad * C, HWp)

    # --- pack per-row parameters + the group (block-diagonal ones) matrix
    f32 = jnp.float32
    w1_rep = jnp.tile(jnp.asarray(w1, f32).T, (Nb, 1))                   # (Rb, CA)
    w2_rep = jnp.tile(jnp.asarray(w2, f32), (Nb, 1))                     # (Rb, CA)
    b1_rep = jnp.broadcast_to(jnp.asarray(b1, f32).reshape(1, ca), (Rb, ca))
    b2_rep = jnp.tile(jnp.asarray(b2, f32).reshape(C, 1), (Nb, 1))       # (Rb, 1)
    p = jnp.concatenate([w1_rep, w2_rep, b1_rep, b2_rep], axis=1)        # (Rb, 3*CA+1)

    grp = np.arange(Rb) // C
    g = jnp.asarray(grp[:, None] == grp[None, :], f32)                   # (Rb, Rb)

    kernel = functools.partial(_calayer_kernel, ca_mid=ca,
                               inv_hw=1.0 / HW, neg_slope=NEG_SLOPE)

    cost = pl.CostEstimate(
        flops=4 * N_pad * C * HWp,                   # pool accumulate + gating multiply
        transcendentals=N_pad * C,                   # sigmoid
        bytes_accessed=2 * N_pad * C * HWp * itemsize)

    out = pl.pallas_call(
        kernel,
        out_shape=jax.ShapeDtypeStruct((N_pad * C, HWp), x.dtype),
        grid=(num_blocks,),
        in_specs=[
            pl.BlockSpec((Rb, Rb), lambda i: (0, 0)),        # G (resident, copied once)
            pl.BlockSpec(p.shape, lambda i: (0, 0)),         # packed params (resident)
            pl.BlockSpec((Rb, HWp), lambda i: (i, 0)),       # x rows
        ],
        out_specs=pl.BlockSpec((Rb, HWp), lambda i: (i, 0)),
        compiler_params=pltpu.CompilerParams(dimension_semantics=("parallel",)),
        cost_estimate=cost,
    )(g, p, xf)

    out = out.reshape(N_pad, C, HWp)[:N, :, :HW].reshape(N, C, H, W)
    return out


# ---------------------------------------------------------------------------
# Pure-JAX reference (same math) for correctness checking
# ---------------------------------------------------------------------------
def calayer_ref(x, w1, b1, w2, b2):
    xf = x.astype(jnp.float32)
    pooled = jnp.mean(xf, axis=(2, 3))                            # (N, C)
    z = pooled @ jnp.asarray(w1, jnp.float32).T + b1              # (N, CA)
    z = jnp.where(z >= 0, z, NEG_SLOPE * z)
    s = jax.nn.sigmoid(z @ jnp.asarray(w2, jnp.float32).T + b2)   # (N, C)
    return xf * s[:, :, None, None]


if __name__ == "__main__":
    key = jax.random.PRNGKey(0)

    #          N  C  H   W   dtype          atol/rtol
    cases = [(2, 4, 16, 16, jnp.float32, 1e-4),     # module's nominal small shape
             (3, 8, 10, 10, jnp.float32, 1e-4),     # HW=100 -> padded to 128, odd N
             (2, 4, 16, 16, jnp.bfloat16, 5e-2)]    # bf16 gating path (v6e/v7x)

    for (N, C, H, W, dt, tol) in cases:
        key, kx, k1, k2, k3, k4 = jax.random.split(key, 6)
        x = jax.random.normal(kx, (N, C, H, W), jnp.float32).astype(dt)
        # PyTorch param mapping:
        #   Conv2d(C, 4, 1): weight (4, C, 1, 1) -> w1 (4, C); bias (4,) -> b1
        #   Conv2d(4, C, 1): weight (C, 4, 1, 1) -> w2 (C, 4); bias (C,) -> b2
        w1 = 0.1 * jax.random.normal(k1, (CA_MID, C), jnp.float32)
        b1 = 0.1 * jax.random.normal(k2, (CA_MID,), jnp.float32)
        w2 = 0.1 * jax.random.normal(k3, (C, CA_MID), jnp.float32)
        b2 = 0.1 * jax.random.normal(k4, (C,), jnp.float32)

        out = jax.block_until_ready(calayer_pallas(x, w1, b1, w2, b2))
        ref = calayer_ref(x, w1, b1, w2, b2)
        np.testing.assert_allclose(np.asarray(out, np.float32), np.asarray(ref),
                                   rtol=tol, atol=tol)

    print("KERNEL_OK")
</pallas_src>

<mosaic_0001>
module attributes {stable_mosaic.version = 11 : i64} {
  func.func @_calayer_kernel(%arg0: i32, %arg1: memref<8x8xf32, #tpu.memory_space<vmem>>, %arg2: memref<8x13xf32, #tpu.memory_space<vmem>>, %arg3: memref<8x256xf32, #tpu.memory_space<vmem>>, %arg4: memref<8x256xf32, #tpu.memory_space<vmem>>) attributes {dimension_semantics = [#tpu.dimension_semantics<parallel>], iteration_bounds = array<i64: 1>, scalar_prefetch = 0 : i64, scratch_operands = 0 : i64, tpu.core_type = #tpu.core_type<tc>, window_params = [{pipeline_mode = #tpu.pipeline_mode<synchronous>, transform_indices = @transform_0, window_bounds = array<i64: 8, 8>}, {pipeline_mode = #tpu.pipeline_mode<synchronous>, transform_indices = @transform_1, window_bounds = array<i64: 8, 13>}, {transform_indices = @transform_2, window_bounds = array<i64: 8, 256>}, {transform_indices = @transform_3, window_bounds = array<i64: 8, 256>}]} {
    %c0 = arith.constant 0 : index
    %c0_0 = arith.constant 0 : index
    %0 = vector.load %arg3[%c0, %c0_0] : memref<8x256xf32, #tpu.memory_space<vmem>>, vector<8x256xf32>
    %cst = arith.constant dense<0.000000e+00> : vector<8xf32>
    %1 = vector.multi_reduction <add>, %0, %cst [1] : vector<8x256xf32> to vector<8xf32>
    %2 = vector.shape_cast %1 : vector<8xf32> to vector<8x1xf32>
    %cst_1 = arith.constant 3.906250e-03 : f32
    %3 = vector.broadcast %cst_1 : f32 to vector<8x1xf32>
    %4 = arith.mulf %2, %3 : vector<8x1xf32>
    %c0_2 = arith.constant 0 : index
    %c0_3 = arith.constant 0 : index
    %5 = vector.load %arg2[%c0_2, %c0_3] : memref<8x13xf32, #tpu.memory_space<vmem>>, vector<8x4xf32>
    %c0_4 = arith.constant 0 : index
    %c4 = arith.constant 4 : index
    %6 = vector.load %arg2[%c0_4, %c4] : memref<8x13xf32, #tpu.memory_space<vmem>>, vector<8x4xf32>
    %c0_5 = arith.constant 0 : index
    %c8 = arith.constant 8 : index
    %7 = vector.load %arg2[%c0_5, %c8] : memref<8x13xf32, #tpu.memory_space<vmem>>, vector<8x4xf32>
    %c0_6 = arith.constant 0 : index
    %c12 = arith.constant 12 : index
    %8 = vector.load %arg2[%c0_6, %c12] : memref<8x13xf32, #tpu.memory_space<vmem>>, vector<8x1xf32>
    %9 = vector.broadcast %4 : vector<8x1xf32> to vector<8x4xf32>
    %10 = arith.mulf %9, %5 : vector<8x4xf32>
    %c0_7 = arith.constant 0 : index
    %c0_8 = arith.constant 0 : index
    %11 = vector.load %arg1[%c0_7, %c0_8] : memref<8x8xf32, #tpu.memory_space<vmem>>, vector<8x8xf32>
    %cst_9 = arith.constant dense<0.000000e+00> : vector<8x4xf32>
    %12 = tpu.matmul %11, %10, %cst_9 {dimension_numbers = #tpu.dot_dimension_numbers<[1], [0], [0], [1], [0, 0, 1, 1], [], []>} : vector<8x8xf32>, vector<8x4xf32>, vector<8x4xf32> -> vector<8x4xf32>
    %13 = arith.addf %12, %7 : vector<8x4xf32>
    %cst_10 = arith.constant 0.000000e+00 : f32
    %14 = vector.broadcast %cst_10 : f32 to vector<8x4xf32>
    %15 = arith.cmpf oge, %13, %14 : vector<8x4xf32>
    %cst_11 = arith.constant 1.000000e-01 : f32
    %16 = vector.broadcast %cst_11 : f32 to vector<8x4xf32>
    %17 = arith.mulf %16, %13 : vector<8x4xf32>
    %18 = arith.select %15, %13, %17 : vector<8x4xi1>, vector<8x4xf32>
    %19 = arith.mulf %18, %6 : vector<8x4xf32>
    %cst_12 = arith.constant dense<0.000000e+00> : vector<8xf32>
    %20 = vector.multi_reduction <add>, %19, %cst_12 [1] : vector<8x4xf32> to vector<8xf32>
    %21 = vector.shape_cast %20 : vector<8xf32> to vector<8x1xf32>
    %22 = arith.addf %21, %8 : vector<8x1xf32>
    %23 = arith.negf %22 : vector<8x1xf32>
    %24 = math.exp %23 : vector<8x1xf32>
    %cst_13 = arith.constant 1.000000e+00 : f32
    %25 = vector.broadcast %cst_13 : f32 to vector<8x1xf32>
    %26 = arith.addf %25, %24 : vector<8x1xf32>
    %27 = arith.divf %25, %26 : vector<8x1xf32>
    %28 = vector.broadcast %27 : vector<8x1xf32> to vector<8x256xf32>
    %29 = arith.mulf %0, %28 : vector<8x256xf32>
    %c0_14 = arith.constant 0 : index
    %c0_15 = arith.constant 0 : index
    %30 = vector.load %arg4[%c0_14, %c0_15] : memref<8x256xf32, #tpu.memory_space<vmem>>, vector<8x256xf32>
    tpu.vector_store %arg4[%c0_14, %c0_15], %29 {strides = array<i32>} : memref<8x256xf32, #tpu.memory_space<vmem>>, vector<8x256xf32>,
    return
  }
  func.func @transform_0(%arg0: i32) -> (i32, i32) {
    %c0_i32 = arith.constant 0 : i32
    %c0_i32_0 = arith.constant 0 : i32
    %c0_i32_1 = arith.constant 0 : i32
    return %c0_i32, %c0_i32_0 : i32, i32
  }
  func.func @transform_1(%arg0: i32) -> (i32, i32) {
    %c0_i32 = arith.constant 0 : i32
    %c0_i32_0 = arith.constant 0 : i32
    %c0_i32_1 = arith.constant 0 : i32
    return %c0_i32, %c0_i32_0 : i32, i32
  }
  func.func @transform_2(%arg0: i32) -> (i32, i32) {
    %c0_i32 = arith.constant 0 : i32
    %c0_i32_0 = arith.constant 0 : i32
    return %arg0, %c0_i32 : i32, i32
  }
  func.func @transform_3(%arg0: i32) -> (i32, i32) {
    %c0_i32 = arith.constant 0 : i32
    %c0_i32_0 = arith.constant 0 : i32
    return %arg0, %c0_i32 : i32, i32
  }
}

</mosaic_0001>

<llo_original>
// kernel: tpu_custom_call.1
$region0: #{tpu_custom_call.1}
  #allocation0 [shape = 'u32[]', space=smem, size = 0x4, offset = 0x4, fixed_abs, tag = 'smem constant byte address 0x4 - core index']
  #allocation1 [shape = 'u32[144,128]{1,0:T(1,128)}', space=vmem, size = 0x12000, scoped, tag = 'internal scratch']
  %s0 = inlined_call_operand.hbm [shape: f32[8,8], index: 0, kind: input, shape index: {}]
  %s1 = inlined_call_operand.hbm [shape: f32[8,13], index: 1, kind: input, shape index: {}]
  %s2 = inlined_call_operand.hbm [shape: f32[8,256], index: 2, kind: input, shape index: {}]
  %s3 = inlined_call_operand.hbm [shape: f32[8,256], index: 3, kind: output, shape index: {}]
  %s4 = sld [smem:[#allocation0]]
  $region34: #{tpu_custom_call.1} parent=0
    _
  %s6 = ssub.s32 1, %s4
  %s7 = scalar_select 0, %s6, %s4
  $region1: #{tpu_custom_call.1} parent=0
    #allocation2 [shape = 'u8[4096]{0}', space=vmem, size = 0x1000, scoped, tag = 'input window, operand 0, single buffered']
    #allocation3 [shape = 's32[1]{0}', space=sflag, size = 0x4, scoped, tag = 'scoped memory for tpu_custom_call.1']
    #allocation4 [shape = 's32[1]{0}', space=sflag, size = 0x4, scoped, tag = 'scoped memory for tpu_custom_call.1']
    #allocation5 [shape = 'u8[4096]{0}', space=vmem, size = 0x1000, scoped, tag = 'input window, operand 1, single buffered']
    #allocation6 [shape = 's32[1]{0}', space=sflag, size = 0x4, scoped, tag = 'scoped memory for tpu_custom_call.1']
    #allocation7 [shape = 'u8[8192]{0}', space=vmem, size = 0x2000, scoped, tag = 'input window, operand 2, single buffered']
    #allocation8 [shape = 'u8[8192]{0}', space=vmem, size = 0x2000, scoped, tag = 'output window, operand 0, single buffered']
    %8 = vsyncpa [#allocation3], 0
    %9 = vsyncpa [#allocation6], 0
    %10 = vsyncpa [#allocation4], 0
    // Predicated region
    $region2: #{tpu_custom_call.1} parent=1 // pred_check
      _
    $region3: #{tpu_custom_call.1} parent=1 // pred_check_branch
      %12 = sbr.rel (0) target = $region5
    $region4: #{tpu_custom_call.1} parent=1 // pred_region
      %s14 = ssub.s32 128, 128
      %15 = vsyncadd [#allocation3], %s14
      %s17 = sshll.u32 [#allocation2], 4
      %s18 = int_to_ptr.vmem [resolvable:$true] %s17
      %20 = dma.hbm_to_vmem [thread:$0]  %s0, 128, %s18, [#allocation3]
    $region5: #{tpu_custom_call.1} parent=1 // pred_fallthru
      _
    // Predicated region
    $region6: #{tpu_custom_call.1} parent=1 // pred_check
      _
    $region7: #{tpu_custom_call.1} parent=1 // pred_check_branch
      %22 = sbr.rel (0) target = $region9
    $region8: #{tpu_custom_call.1} parent=1 // pred_region
      %s24 = ssub.s32 128, 128
      %25 = vsyncadd [#allocation6], %s24
      %s27 = sshll.u32 [#allocation5], 4
      %s28 = int_to_ptr.vmem [resolvable:$true] %s27
      %30 = dma.hbm_to_vmem [thread:$0]  %s1, 128, %s28, [#allocation6]
    $region9: #{tpu_custom_call.1} parent=1 // pred_fallthru
      _
    // Predicated region
    $region10: #{tpu_custom_call.1} parent=1 // pred_check
      _
    $region11: #{tpu_custom_call.1} parent=1 // pred_check_branch
      %32 = sbr.rel (0) target = $region13
    $region12: #{tpu_custom_call.1} parent=1 // pred_region
      %s34 = ssub.s32 256, 256
      %35 = vsyncadd [#allocation6], %s34
      %s37 = sshll.u32 [#allocation7], 4
      %s38 = int_to_ptr.vmem [resolvable:$true] %s37
      %40 = dma.hbm_to_vmem [thread:$0]  %s2, 256, %s38, [#allocation6]
    $region13: #{tpu_custom_call.1} parent=1 // pred_fallthru
      _
    // Predicated region
    $region14: #{tpu_custom_call.1} parent=1 // pred_check
      _
    $region15: #{tpu_custom_call.1} parent=1 // pred_check_branch
      %42 = sbr.rel (0) target = $region17
    $region16: #{tpu_custom_call.1} parent=1 // pred_region
      %43 = dma.done [#allocation3], 128
    $region17: #{tpu_custom_call.1} parent=1 // pred_fallthru
      _
    // Predicated region
    $region18: #{tpu_custom_call.1} parent=1 // pred_check
      _
    $region19: #{tpu_custom_call.1} parent=1 // pred_check_branch
      %45 = sbr.rel (0) target = $region21
    $region20: #{tpu_custom_call.1} parent=1 // pred_region
      %46 = dma.done [#allocation6], 128
    $region21: #{tpu_custom_call.1} parent=1 // pred_fallthru
      _
    // Predicated region
    $region22: #{tpu_custom_call.1} parent=1 // pred_check
      _
    $region23: #{tpu_custom_call.1} parent=1 // pred_check_branch
      %48 = sbr.rel (0) target = $region25
    $region24: #{tpu_custom_call.1} parent=1 // pred_region
      %49 = dma.done [#allocation6], 256
    $region25: #{tpu_custom_call.1} parent=1 // pred_fallthru
      _
    %v50 = vld [vmem:[#allocation7] sm:$0xff]
    %v51 = vld [vmem:[#allocation7 + $0x8] sm:$0xff]
    %v52 = vadd.f32 %v50, %v51
    %53 = vadd.xlane.f32.xlu0 %v52
    %v54 = vpop.xlane.xlu0 %53
    %v55 = vmul.f32 %v54, 0.00390625
    %v56 = vld [vmem:[#allocation5] sm:$0xff]
    %v57 = vmul.f32 %v55, %v56
    %v58 = vld [vmem:[#allocation2] sm:$0xff]
    %60 = vrot.lane.b32.xlu0 %v56, 120
    %v61 = vpop.permute.xlu0 %60
    %vm63 = vcmask 64512
    %v65 = vsel %vm63, %v58, 0
    %67 = vmatprep.subr.mxu0 0.0
    %68 = vmatpush1.msra.mxu0 %v57
    %69 = vmatprep.subr.mxu0 0.0
    %70 = vmatpush1.msra.mxu0 0.0
    %71 = vmatprep.subr.mxu0 0.0
    %72 = vmatpush1.msra.mxu0 0.0
    %73 = vmatprep.subr.mxu0 0.0
    %74 = vmatpush1.msra.mxu0 0.0
    %75 = vmatprep.subr.mxu0 0.0
    %76 = vmatpush1.msra.mxu0 0.0
    %77 = vmatprep.subr.mxu0 0.0
    %78 = vmatpush1.msra.mxu0 0.0
    %79 = vmatprep.subr.mxu0 0.0
    %80 = vmatpush1.msra.mxu0 0.0
    %81 = vmatprep.subr.mxu0 0.0
    %82 = vmatpush1.msra.mxu0 0.0
    %83 = vmatprep.subr.mxu0 0.0
    %84 = vmatpush1.msra.mxu0 0.0
    %85 = vmatprep.subr.mxu0 0.0
    %86 = vmatpush1.msra.mxu0 0.0
    %87 = vmatprep.subr.mxu0 0.0
    %88 = vmatpush1.msra.mxu0 0.0
    %89 = vmatprep.subr.mxu0 0.0
    %90 = vmatpush1.msra.mxu0 0.0
    %91 = vmatprep.subr.mxu0 0.0
    %92 = vmatpush1.msra.mxu0 0.0
    %93 = vmatprep.subr.mxu0 0.0
    %94 = vmatpush1.msra.mxu0 0.0
    %95 = vmatprep.subr.mxu0 0.0
    %96 = vmatpush1.msra.mxu0 0.0
    %97 = vmatprep.subr.mxu0 0.0
    %98 = vmatpush1.msra.mxu0 0.0
    %99 = vmatprep.subr.mxu0 0.0
    %100 = vmatpush1.msra.mxu0 0.0
    %101 = vmatprep.subr.mxu0 0.0
    %102 = vmatpush1.msra.mxu0 0.0
    %103 = vmatprep.subr.mxu0 0.0
    %104 = vmatpush1.msra.mxu0 0.0
    %105 = vmatprep.subr.mxu0 0.0
    %106 = vmatpush1.msra.mxu0 0.0
    %107 = vmatprep.subr.mxu0 0.0
    %108 = vmatpush1.msra.mxu0 0.0
    %109 = vmatprep.subr.mxu0 0.0
    %110 = vmatpush1.msra.mxu0 0.0
    %111 = vmatprep.subr.mxu0 0.0
    %112 = vmatpush1.msra.mxu0 0.0
    %113 = vmatprep.subr.mxu0 0.0
    %114 = vmatpush1.msra.mxu0 0.0
    %115 = vmatprep.subr.mxu0 0.0
    %116 = vmatpush1.msra.mxu0 0.0
    %117 = vmatprep.subr.mxu0 0.0
    %118 = vmatpush1.msra.mxu0 0.0
    %119 = vmatprep.subr.mxu0 0.0
    %120 = vmatpush1.msra.mxu0 0.0
    %121 = vmatprep.subr.mxu0 0.0
    %122 = vmatpush1.msra.mxu0 0.0
    %123 = vmatprep.subr.mxu0 0.0
    %124 = vmatpush1.msra.mxu0 0.0
    %125 = vmatprep.subr.mxu0 0.0
    %126 = vmatpush1.msra.mxu0 0.0
    %127 = vmatprep.subr.mxu0 0.0
    %128 = vmatpush1.msra.mxu0 0.0
    %129 = vmatprep.subr.mxu0 0.0
    %130 = vmatpush1.msra.mxu0 0.0
    %131 = vmatprep.mubr.f32.mxu0 0.0
    %132 = vmatmul.mubr.f32.gmra.mrb[0].mxu0 %v65
    %v133 = vpop.f32.mrb[0].mxu0
    %v134 = vadd.f32 %v61, %v133
    %v135 = vpop.f32.mrb[0].mxu0
    %136 = vdwg.mxu0
    %vm137 = vcmp.ge.f32.partialorder %v134, 0.0
    %v138 = vmul.f32 %v134, 0.1
    %v139 = vsel %vm137, %v134, %v138
    %140 = vrot.lane.b32.xlu0 %v56, 124
    %v141 = vpop.permute.xlu0 %140
    %v143 = vmul.f32 %v139, %v141
    %vm144 = vcmask 31744
    %v145 = vsel %vm144, %v143, 0.0
    %146 = vadd.xlane.f32.xlu0 %v145
    %v147 = vpop.xlane.xlu0 %146
    %v148 = vadd.f32 %v147, %v56
    %v149 = vxor.u32 %v148, 2147483648
    %v150 = vmul.f32 %v149, 1.442695
    %v151 = vpow.pop %v150
    %v152 = vadd.f32 %v151, 1.0
    %v153 = vrcp.pop %v152
    %v154 = vmul.f32 1.0, %v153
    %156 = vset.pattern.permute.xlu0 12
    %157 = vperm.xlu0 %156, %v154
    %v158 = vpop.permute.xlu0 %157
    %v160 = vmul.f32 %v50, %v158
    %v161 = vmul.f32 %v51, %v158
    %162 = vst [vmem:[#allocation8] sm:$0xff] %v160
    %163 = vst [vmem:[#allocation8 + $0x8] sm:$0xff] %v161
    // Predicated region
    $region26: #{tpu_custom_call.1} parent=1 // pred_check
      _
    $region27: #{tpu_custom_call.1} parent=1 // pred_check_branch
      %165 = sbr.rel (0) target = $region29
    $region28: #{tpu_custom_call.1} parent=1 // pred_region
      %s167 = ssub.s32 256, 256
      %168 = vsyncadd [#allocation4], %s167
      %s170 = sshll.u32 [#allocation8], 4
      %s171 = int_to_ptr.vmem [resolvable:$true] %s170
      %173 = dma.vmem_to_hbm [thread:$0]  %s171, 256, %s3, [#allocation4]
    $region29: #{tpu_custom_call.1} parent=1 // pred_fallthru
      _
    // Predicated region
    $region30: #{tpu_custom_call.1} parent=1 // pred_check
      _
    $region31: #{tpu_custom_call.1} parent=1 // pred_check_branch
      %175 = sbr.rel (0) target = $region33
    $region32: #{tpu_custom_call.1} parent=1 // pred_region
      %176 = dma.done [#allocation4], 256
    $region33: #{tpu_custom_call.1} parent=1 // pred_fallthru
      _
    %177 = vsyncpa [#allocation3], 1
    %178 = vsyncpa [#allocation6], 1
    %179 = vsyncpa [#allocation4], 1

</llo_original>
